<compile_context>
chip_gen: v6e
topology: v6e:2x2x1
jax: 0.10.0
libtpu: 0.0.40
codegen_flags: <defaults>
</compile_context>

<pallas_src>
import math

import jax
import jax.numpy as jnp
import numpy as np
from jax.experimental import pallas as pl
from jax.experimental.pallas import tpu as pltpu


# ------------------------------ fused Pallas kernel ------------------------------ #

def _nas_fused_kernel(x_ref, r1_ref, b1_ref, r2_ref, b2_ref, wl_ref, bl_ref, o_ref):
    """Entire NASModel forward for one batch tile; 3 matmuls, all intermediates in vregs.

    Row layout of x / y1 / y2: r = q * bt + n  (q = spatial-row group, n = sample in
    tile).  Lane layout packs the within-group spatial rows, width and channels.
    """
    bt = o_ref.shape[1]                 # samples in this batch tile
    x = x_ref[0]                        # (8*bt, 2*W*Cin) = (8*bt, 128) f32
    rows = x.shape[0]
    half = x.shape[1] // 2              # 64 lanes = one input image row (W*Cin)

    def shift_dn(a):                    # a[r - bt]  (previous row group), zero at top
        ri = jax.lax.broadcasted_iota(jnp.int32, a.shape, 0)
        return jnp.where(ri >= bt, pltpu.roll(a, shift=bt, axis=0), 0.0)

    def shift_up(a):                    # a[r + bt]  (next row group), zero at bottom
        ri = jax.lax.broadcasted_iota(jnp.int32, a.shape, 0)
        return jnp.where(ri < rows - bt, pltpu.roll(a, shift=rows - bt, axis=0), 0.0)

    def mxu(a, w_ref):                  # bf16 operands, f32 accumulation
        return jnp.dot(a.astype(jnp.bfloat16), w_ref[...],
                       preferred_element_type=jnp.float32)

    # ---- conv1 (3x3, stride 1, pad 1, 4->8) + BN + ReLU : one matmul, K = 256 ----
    # xcat1 lanes = input rows [2q-1, 2q, 2q+1, 2q+2]  (each 64 lanes of (w, cin)).
    x_dn, x_up = shift_dn(x), shift_up(x)
    xcat1 = jnp.concatenate(
        [x_dn[:, half:], x[:, :half], x[:, half:], x_up[:, :half]], axis=1)
    y1 = jnp.maximum(mxu(xcat1, r1_ref) + b1_ref[...], 0.0)     # (8*bt, 256)

    # ---- conv2 (3x3, stride 2, pad 1, 8->8) + BN + ReLU : one matmul, K = 384 ----
    # xcat2 lanes = conv1 rows [2ho-1, 2ho, 2ho+1]  (each 128 lanes of (w, c1)).
    h1 = y1.shape[1] // 2               # 128 lanes = one conv1 output row (W*Cout1)
    y1_dn = shift_dn(y1)
    xcat2 = jnp.concatenate([y1_dn[:, h1:], y1[:, :h1], y1[:, h1:]], axis=1)
    y2 = jnp.maximum(mxu(xcat2, r2_ref) + b2_ref[...], 0.0)     # (8*bt, 64)

    # dropout(p=0.2): eval mode -> identity.
    # TODO(synk): training-mode dropout is stochastic and not reproduced here.

    # ---- classifier: fold 8 spatial rows/sample into lanes, then one K=512 matmul ----
    # (torch's NCHW view(N,-1) flatten order is baked into the pre-permuted wl weight.)
    n_ho = rows // bt
    flat = jnp.concatenate([y2[ho * bt:(ho + 1) * bt, :] for ho in range(n_ho)], axis=1)
    o_ref[0] = mxu(flat, wl_ref) + bl_ref[...]                  # (bt, num_classes)


def nas_forward(prep, x_nchw, batch_tile=None):
    """Per-inference path: one tiny input re-layout + one fused pallas_call."""
    n, c_in, h, w = x_nchw.shape
    q = h // 2
    lane_in = 2 * w * c_in
    if batch_tile is None:
        batch_tile = n if n <= 8 else 8
    assert n % batch_tile == 0, "batch must be divisible by batch_tile"
    bt, t = batch_tile, n // batch_tile
    rows = q * bt
    num_classes = prep["bl"].shape[-1]

    # One-time relayout: NCHW -> (tiles, (h//2)*bt, 2*W*Cin); rows are row-group-major /
    # sample-minor so the conv vertical taps become plain sublane rolls in the kernel.
    xp = (jnp.transpose(x_nchw, (0, 2, 3, 1))
          .reshape(t, bt, q, lane_in)
          .transpose(0, 2, 1, 3)
          .reshape(t, rows, lane_in))

    const_names = ("r1", "b1", "r2", "b2", "wl", "bl")
    const_specs = [pl.BlockSpec(prep[k].shape, lambda i, nd=prep[k].ndim: (0,) * nd)
                   for k in const_names]

    flops = 2 * t * (rows * prep["r1"].shape[0] * prep["r1"].shape[1]
                     + rows * prep["r2"].shape[0] * prep["r2"].shape[1]
                     + bt * prep["wl"].shape[0] * prep["wl"].shape[1])
    bytes_accessed = (xp.size * 4 + n * num_classes * 4
                      + sum(int(np.prod(prep[k].shape)) * prep[k].dtype.itemsize
                            for k in const_names))

    out = pl.pallas_call(
        _nas_fused_kernel,
        out_shape=jax.ShapeDtypeStruct((t, bt, num_classes), jnp.float32),
        grid=(t,),
        in_specs=[pl.BlockSpec((1, rows, lane_in), lambda i: (i, 0, 0))] + const_specs,
        out_specs=pl.BlockSpec((1, bt, num_classes), lambda i: (i, 0, 0)),
        compiler_params=pltpu.CompilerParams(dimension_semantics=("parallel",)),
        cost_estimate=pl.CostEstimate(flops=flops, transcendentals=0,
                                      bytes_accessed=bytes_accessed),
    )(xp, *(prep[k] for k in const_names))
    return out.reshape(n, num_classes)


# --------------------- one-time weight / layout preparation ---------------------- #

def prepare_params(params, *, h_in=16, w_in=16, eps=1e-5):
    """Fold BN + conv tap/stride/pad structure + torch flatten order into three small,
    batch-independent matmul constants (bf16 for the MXU operands).  Done once."""
    w1 = np.asarray(params["w1"], np.float32)          # (Cout1, Cin1, 3, 3) OIHW
    w2 = np.asarray(params["w2"], np.float32)          # (Cout2, Cin2, 3, 3)
    wl = np.asarray(params["wl"], np.float32)          # (num_classes, Cout2*H2*W2)
    bl = np.asarray(params["bl"], np.float32)

    def bn_fold(bn):
        g = np.asarray(bn["gamma"], np.float32); b = np.asarray(bn["beta"], np.float32)
        m = np.asarray(bn["mean"], np.float32);  v = np.asarray(bn["var"], np.float32)
        s = g / np.sqrt(v + eps)
        return s, b - m * s

    s1, t1 = bn_fold(params["bn1"])
    s2, t2 = bn_fold(params["bn2"])
    co1, ci1 = w1.shape[:2]
    co2, ci2 = w2.shape[:2]
    w1o, w2o, h2o = w_in, w_in // 2, h_in // 2
    num_classes = wl.shape[0]

    # R1: (4*W*Cin1, 2*W*Cout1).  Row = packed input row j (= 2q-1+j) x (wi, ci);
    # col = output parity p x (wo, co).  Encodes 3x3 taps, stride 1, zero pad, BN1 scale.
    r1 = np.zeros((4 * w_in * ci1, 2 * w1o * co1), np.float32)
    for p in range(2):
        for kh in range(3):
            j = p + kh
            for kw in range(3):
                blk = (w1[:, :, kh, kw] * s1[:, None]).T          # (Cin1, Cout1)
                for wo in range(w1o):
                    wi = wo + kw - 1
                    if 0 <= wi < w_in:
                        r1[j * w_in * ci1 + wi * ci1: j * w_in * ci1 + (wi + 1) * ci1,
                           p * w1o * co1 + wo * co1: p * w1o * co1 + (wo + 1) * co1] += blk
    b1 = np.tile(t1, 2 * w1o).reshape(1, 2 * w1o * co1)

    # R2: (3*W*Cout1, W2*Cout2).  Row = vertical tap kh x (wi, ci); col = (wo, co).
    # Encodes 3x3 taps, stride 2, zero pad, BN2 scale.
    r2 = np.zeros((3 * w1o * ci2, w2o * co2), np.float32)
    for kh in range(3):
        for kw in range(3):
            blk = (w2[:, :, kh, kw] * s2[:, None]).T              # (Cin2, Cout2)
            for wo in range(w2o):
                wi = 2 * wo + kw - 1
                if 0 <= wi < w1o:
                    r2[kh * w1o * ci2 + wi * ci2: kh * w1o * ci2 + (wi + 1) * ci2,
                       wo * co2:(wo + 1) * co2] += blk
    b2 = np.tile(t2, w2o).reshape(1, w2o * co2)

    # Classifier: permute so the kernel's (ho, wo, co) flat layout matches torch's
    # NCHW x.view(N, -1) order (index = co*H2*W2 + ho*W2 + wo).
    wl_perm = (wl.reshape(num_classes, co2, h2o, w2o)
               .transpose(2, 3, 1, 0)
               .reshape(h2o * w2o * co2, num_classes))

    return dict(
        r1=jnp.asarray(r1, jnp.bfloat16), b1=jnp.asarray(b1, jnp.float32),
        r2=jnp.asarray(r2, jnp.bfloat16), b2=jnp.asarray(b2, jnp.float32),
        wl=jnp.asarray(wl_perm, jnp.bfloat16),
        bl=jnp.asarray(bl.reshape(1, -1), jnp.float32),
    )


# ----------------------------- parameter construction ---------------------------- #

def init_params(key):
    k1, k2, k3 = jax.random.split(key, 3)
    # conv1: 4 -> 8, 3x3, stride 1   (goog: N(0, sqrt(2 / (k*k*Cout))))
    c1_out, c1_in = 8, 4
    w1 = jax.random.normal(k1, (c1_out, c1_in, 3, 3), jnp.float32) * math.sqrt(2.0 / (3 * 3 * c1_out))
    # conv2: 8 -> 8, 3x3, stride 2
    c2_out, c2_in = 8, 8
    w2 = jax.random.normal(k2, (c2_out, c2_in, 3, 3), jnp.float32) * math.sqrt(2.0 / (3 * 3 * c2_out))
    bn1 = dict(gamma=jnp.ones((c1_out,)), beta=jnp.zeros((c1_out,)),
               mean=jnp.zeros((c1_out,)), var=jnp.ones((c1_out,)))
    bn2 = dict(gamma=jnp.ones((c2_out,)), beta=jnp.zeros((c2_out,)),
               mean=jnp.zeros((c2_out,)), var=jnp.ones((c2_out,)))
    # classifier: Linear(8*8*8 -> 10), goog: U(-1/sqrt(out), 1/sqrt(out)), bias 0
    dim_in, dim_out = 8 * 8 * 8, 10
    r = 1.0 / math.sqrt(dim_out)
    wl = jax.random.uniform(k3, (dim_out, dim_in), jnp.float32, minval=-r, maxval=r)
    bl = jnp.zeros((dim_out,), jnp.float32)
    return dict(w1=w1, bn1=bn1, w2=w2, bn2=bn2, wl=wl, bl=bl)


# --------------------------- plain-JAX reference (check) -------------------------- #

def reference_forward(params, x, eps=1e-5):
    hp = jax.lax.Precision.HIGHEST

    def block(x, w, bn, stride):
        y = jax.lax.conv_general_dilated(
            x, w, (stride, stride), ((1, 1), (1, 1)),
            dimension_numbers=("NCHW", "OIHW", "NCHW"), precision=hp)
        scale = bn["gamma"] / jnp.sqrt(bn["var"] + eps)
        shift = bn["beta"] - bn["mean"] * scale
        return jnp.maximum(y * scale[None, :, None, None] + shift[None, :, None, None], 0.0)

    y = block(x, params["w1"], params["bn1"], 1)
    y = block(y, params["w2"], params["bn2"], 2)
    y = y.reshape(y.shape[0], -1)
    return jnp.dot(y, params["wl"].T, precision=hp) + params["bl"]


# --------------------------------------- main -------------------------------------- #

if __name__ == "__main__":
    key = jax.random.PRNGKey(0)
    pkey, xkey = jax.random.split(key)
    params = init_params(pkey)
    x = jax.random.normal(xkey, (2, 4, 16, 16), jnp.float32)     # NCHW input

    prep = prepare_params(params, h_in=16, w_in=16)              # one-time weight re-layout
    fwd = jax.jit(nas_forward, static_argnames=("batch_tile",))
    out = jax.block_until_ready(fwd(prep, x, batch_tile=1))      # grid=(2,), "parallel"
    assert out.shape == (2, 10), out.shape

    ref = jax.block_until_ready(reference_forward(params, x))
    # bf16 MXU operands (per perf review) trade a little precision; f32 accumulation.
    np.testing.assert_allclose(np.asarray(out), np.asarray(ref), rtol=5e-2, atol=1e-1)
    print("KERNEL_OK")
</pallas_src>

<mosaic_0001>
module attributes {stable_mosaic.version = 11 : i64} {
  func.func @_nas_fused_kernel(%arg0: i32, %arg1: memref<1x8x128xf32, #tpu.memory_space<vmem>>, %arg2: memref<256x256xbf16, #tpu.memory_space<vmem>>, %arg3: memref<1x256xf32, #tpu.memory_space<vmem>>, %arg4: memref<384x64xbf16, #tpu.memory_space<vmem>>, %arg5: memref<1x64xf32, #tpu.memory_space<vmem>>, %arg6: memref<512x10xbf16, #tpu.memory_space<vmem>>, %arg7: memref<1x10xf32, #tpu.memory_space<vmem>>, %arg8: memref<1x1x10xf32, #tpu.memory_space<vmem>>) attributes {dimension_semantics = [#tpu.dimension_semantics<parallel>], iteration_bounds = array<i64: 2>, scalar_prefetch = 0 : i64, scratch_operands = 0 : i64, tpu.core_type = #tpu.core_type<tc>, window_params = [{transform_indices = @transform_0, window_bounds = array<i64: 1, 8, 128>}, {pipeline_mode = #tpu.pipeline_mode<synchronous>, transform_indices = @transform_1, window_bounds = array<i64: 256, 256>}, {pipeline_mode = #tpu.pipeline_mode<synchronous>, transform_indices = @transform_2, window_bounds = array<i64: 1, 256>}, {pipeline_mode = #tpu.pipeline_mode<synchronous>, transform_indices = @transform_3, window_bounds = array<i64: 384, 64>}, {pipeline_mode = #tpu.pipeline_mode<synchronous>, transform_indices = @transform_4, window_bounds = array<i64: 1, 64>}, {pipeline_mode = #tpu.pipeline_mode<synchronous>, transform_indices = @transform_5, window_bounds = array<i64: 512, 10>}, {pipeline_mode = #tpu.pipeline_mode<synchronous>, transform_indices = @transform_6, window_bounds = array<i64: 1, 10>}, {transform_indices = @transform_7, window_bounds = array<i64: 1, 1, 10>}]} {
    %c0 = arith.constant 0 : index
    %c0_0 = arith.constant 0 : index
    %c0_1 = arith.constant 0 : index
    %0 = vector.load %arg1[%c0, %c0_0, %c0_1] : memref<1x8x128xf32, #tpu.memory_space<vmem>>, vector<1x8x128xf32>
    %1 = vector.shape_cast %0 : vector<1x8x128xf32> to vector<8x128xf32>
    %2 = tpu.iota {dimensions = array<i32: 0>} : vector<8x128xi32>
    %c1_i32 = arith.constant 1 : i32
    %3 = vector.broadcast %c1_i32 : i32 to vector<8x128xi32>
    %4 = arith.cmpi sge, %2, %3 : vector<8x128xi32>
    %c1_i32_2 = arith.constant 1 : i32
    %5 = tpu.dynamic_rotate %1 by %c1_i32_2 dim 0 : vector<8x128xf32>, i32 -> vector<8x128xf32>
    %cst = arith.constant 0.000000e+00 : f32
    %6 = vector.broadcast %cst : f32 to vector<8x128xf32>
    %7 = arith.select %4, %5, %6 : vector<8x128xi1>, vector<8x128xf32>
    %8 = tpu.iota {dimensions = array<i32: 0>} : vector<8x128xi32>
    %c7_i32 = arith.constant 7 : i32
    %9 = vector.broadcast %c7_i32 : i32 to vector<8x128xi32>
    %10 = arith.cmpi slt, %8, %9 : vector<8x128xi32>
    %c7_i32_3 = arith.constant 7 : i32
    %11 = tpu.dynamic_rotate %1 by %c7_i32_3 dim 0 : vector<8x128xf32>, i32 -> vector<8x128xf32>
    %cst_4 = arith.constant 0.000000e+00 : f32
    %12 = vector.broadcast %cst_4 : f32 to vector<8x128xf32>
    %13 = arith.select %10, %11, %12 : vector<8x128xi1>, vector<8x128xf32>
    %14 = vector.extract_strided_slice %7 {offsets = [0, 64], sizes = [8, 64], strides = [1, 1]} : vector<8x128xf32> to vector<8x64xf32>
    %15 = vector.extract_strided_slice %1 {offsets = [0, 0], sizes = [8, 64], strides = [1, 1]} : vector<8x128xf32> to vector<8x64xf32>
    %16 = vector.extract_strided_slice %1 {offsets = [0, 64], sizes = [8, 64], strides = [1, 1]} : vector<8x128xf32> to vector<8x64xf32>
    %17 = vector.extract_strided_slice %13 {offsets = [0, 0], sizes = [8, 64], strides = [1, 1]} : vector<8x128xf32> to vector<8x64xf32>
    %18 = tpu.concatenate %14, %15, %16, %17 in 1 : vector<8x64xf32>, vector<8x64xf32>, vector<8x64xf32>, vector<8x64xf32> -> vector<8x256xf32>
    %19 = arith.truncf %18 : vector<8x256xf32> to vector<8x256xbf16>
    %c0_5 = arith.constant 0 : index
    %c0_6 = arith.constant 0 : index
    %20 = vector.load %arg2[%c0_5, %c0_6] : memref<256x256xbf16, #tpu.memory_space<vmem>>, vector<256x256xbf16>
    %cst_7 = arith.constant dense<0.000000e+00> : vector<8x256xf32>
    %21 = tpu.matmul %19, %20, %cst_7 {dimension_numbers = #tpu.dot_dimension_numbers<[1], [0], [0], [1], [0, 0, 1, 1], [], []>} : vector<8x256xbf16>, vector<256x256xbf16>, vector<8x256xf32> -> vector<8x256xf32>
    %c0_8 = arith.constant 0 : index
    %c0_9 = arith.constant 0 : index
    %22 = vector.load %arg3[%c0_8, %c0_9] : memref<1x256xf32, #tpu.memory_space<vmem>>, vector<1x256xf32>
    %23 = vector.broadcast %22 : vector<1x256xf32> to vector<8x256xf32>
    %24 = arith.addf %21, %23 : vector<8x256xf32>
    %cst_10 = arith.constant 0.000000e+00 : f32
    %25 = vector.broadcast %cst_10 : f32 to vector<8x256xf32>
    %26 = arith.maximumf %24, %25 : vector<8x256xf32>
    %27 = tpu.iota {dimensions = array<i32: 0>} : vector<8x256xi32>
    %c1_i32_11 = arith.constant 1 : i32
    %28 = vector.broadcast %c1_i32_11 : i32 to vector<8x256xi32>
    %29 = arith.cmpi sge, %27, %28 : vector<8x256xi32>
    %c1_i32_12 = arith.constant 1 : i32
    %30 = tpu.dynamic_rotate %26 by %c1_i32_12 dim 0 : vector<8x256xf32>, i32 -> vector<8x256xf32>
    %cst_13 = arith.constant 0.000000e+00 : f32
    %31 = vector.broadcast %cst_13 : f32 to vector<8x256xf32>
    %32 = arith.select %29, %30, %31 : vector<8x256xi1>, vector<8x256xf32>
    %33 = vector.extract_strided_slice %32 {offsets = [0, 128], sizes = [8, 128], strides = [1, 1]} : vector<8x256xf32> to vector<8x128xf32>
    %34 = vector.extract_strided_slice %26 {offsets = [0, 0], sizes = [8, 128], strides = [1, 1]} : vector<8x256xf32> to vector<8x128xf32>
    %35 = vector.extract_strided_slice %26 {offsets = [0, 128], sizes = [8, 128], strides = [1, 1]} : vector<8x256xf32> to vector<8x128xf32>
    %36 = tpu.concatenate %33, %34, %35 in 1 : vector<8x128xf32>, vector<8x128xf32>, vector<8x128xf32> -> vector<8x384xf32>
    %37 = arith.truncf %36 : vector<8x384xf32> to vector<8x384xbf16>
    %c0_14 = arith.constant 0 : index
    %c0_15 = arith.constant 0 : index
    %38 = vector.load %arg4[%c0_14, %c0_15] : memref<384x64xbf16, #tpu.memory_space<vmem>>, vector<384x64xbf16>
    %cst_16 = arith.constant dense<0.000000e+00> : vector<8x64xf32>
    %39 = tpu.matmul %37, %38, %cst_16 {dimension_numbers = #tpu.dot_dimension_numbers<[1], [0], [0], [1], [0, 0, 1, 1], [], []>} : vector<8x384xbf16>, vector<384x64xbf16>, vector<8x64xf32> -> vector<8x64xf32>
    %c0_17 = arith.constant 0 : index
    %c0_18 = arith.constant 0 : index
    %40 = vector.load %arg5[%c0_17, %c0_18] : memref<1x64xf32, #tpu.memory_space<vmem>>, vector<1x64xf32>
    %41 = vector.broadcast %40 : vector<1x64xf32> to vector<8x64xf32>
    %42 = arith.addf %39, %41 : vector<8x64xf32>
    %cst_19 = arith.constant 0.000000e+00 : f32
    %43 = vector.broadcast %cst_19 : f32 to vector<8x64xf32>
    %44 = arith.maximumf %42, %43 : vector<8x64xf32>
    %45 = vector.extract_strided_slice %44 {offsets = [0, 0], sizes = [1, 64], strides = [1, 1]} : vector<8x64xf32> to vector<1x64xf32>
    %46 = vector.extract_strided_slice %44 {offsets = [1, 0], sizes = [1, 64], strides = [1, 1]} : vector<8x64xf32> to vector<1x64xf32>
    %47 = vector.extract_strided_slice %44 {offsets = [2, 0], sizes = [1, 64], strides = [1, 1]} : vector<8x64xf32> to vector<1x64xf32>
    %48 = vector.extract_strided_slice %44 {offsets = [3, 0], sizes = [1, 64], strides = [1, 1]} : vector<8x64xf32> to vector<1x64xf32>
    %49 = vector.extract_strided_slice %44 {offsets = [4, 0], sizes = [1, 64], strides = [1, 1]} : vector<8x64xf32> to vector<1x64xf32>
    %50 = vector.extract_strided_slice %44 {offsets = [5, 0], sizes = [1, 64], strides = [1, 1]} : vector<8x64xf32> to vector<1x64xf32>
    %51 = vector.extract_strided_slice %44 {offsets = [6, 0], sizes = [1, 64], strides = [1, 1]} : vector<8x64xf32> to vector<1x64xf32>
    %52 = vector.extract_strided_slice %44 {offsets = [7, 0], sizes = [1, 64], strides = [1, 1]} : vector<8x64xf32> to vector<1x64xf32>
    %53 = tpu.concatenate %45, %46, %47, %48, %49, %50, %51, %52 in 1 : vector<1x64xf32>, vector<1x64xf32>, vector<1x64xf32>, vector<1x64xf32>, vector<1x64xf32>, vector<1x64xf32>, vector<1x64xf32>, vector<1x64xf32> -> vector<1x512xf32>
    %54 = arith.truncf %53 : vector<1x512xf32> to vector<1x512xbf16>
    %c0_20 = arith.constant 0 : index
    %c0_21 = arith.constant 0 : index
    %55 = vector.load %arg6[%c0_20, %c0_21] : memref<512x10xbf16, #tpu.memory_space<vmem>>, vector<512x10xbf16>
    %cst_22 = arith.constant dense<0.000000e+00> : vector<1x10xf32>
    %56 = tpu.matmul %54, %55, %cst_22 {dimension_numbers = #tpu.dot_dimension_numbers<[1], [0], [0], [1], [0, 0, 1, 1], [], []>} : vector<1x512xbf16>, vector<512x10xbf16>, vector<1x10xf32> -> vector<1x10xf32>
    %c0_23 = arith.constant 0 : index
    %c0_24 = arith.constant 0 : index
    %57 = vector.load %arg7[%c0_23, %c0_24] : memref<1x10xf32, #tpu.memory_space<vmem>>, vector<1x10xf32>
    %58 = arith.addf %56, %57 : vector<1x10xf32>
    %c0_25 = arith.constant 0 : index
    %c0_26 = arith.constant 0 : index
    %c0_27 = arith.constant 0 : index
    %59 = vector.load %arg8[%c0_25, %c0_26, %c0_27] : memref<1x1x10xf32, #tpu.memory_space<vmem>>, vector<1x1x10xf32>
    %60 = vector.shape_cast %59 : vector<1x1x10xf32> to vector<1x10xf32>
    %61 = vector.shape_cast %58 : vector<1x10xf32> to vector<1x1x10xf32>
    tpu.vector_store %arg8[%c0_25, %c0_26, %c0_27], %61 {strides = array<i32>} : memref<1x1x10xf32, #tpu.memory_space<vmem>>, vector<1x1x10xf32>,
    return
  }
  func.func @transform_0(%arg0: i32) -> (i32, i32, i32) {
    %c0_i32 = arith.constant 0 : i32
    %c0_i32_0 = arith.constant 0 : i32
    %c0_i32_1 = arith.constant 0 : i32
    return %arg0, %c0_i32, %c0_i32_0 : i32, i32, i32
  }
  func.func @transform_1(%arg0: i32) -> (i32, i32) {
    %c0_i32 = arith.constant 0 : i32
    %c0_i32_0 = arith.constant 0 : i32
    %c0_i32_1 = arith.constant 0 : i32
    return %c0_i32, %c0_i32_0 : i32, i32
  }
  func.func @transform_2(%arg0: i32) -> (i32, i32) {
    %c0_i32 = arith.constant 0 : i32
    %c0_i32_0 = arith.constant 0 : i32
    %c0_i32_1 = arith.constant 0 : i32
    return %c0_i32, %c0_i32_0 : i32, i32
  }
  func.func @transform_3(%arg0: i32) -> (i32, i32) {
    %c0_i32 = arith.constant 0 : i32
    %c0_i32_0 = arith.constant 0 : i32
    %c0_i32_1 = arith.constant 0 : i32
    return %c0_i32, %c0_i32_0 : i32, i32
  }
  func.func @transform_4(%arg0: i32) -> (i32, i32) {
    %c0_i32 = arith.constant 0 : i32
    %c0_i32_0 = arith.constant 0 : i32
    %c0_i32_1 = arith.constant 0 : i32
    return %c0_i32, %c0_i32_0 : i32, i32
  }
  func.func @transform_5(%arg0: i32) -> (i32, i32) {
    %c0_i32 = arith.constant 0 : i32
    %c0_i32_0 = arith.constant 0 : i32
    %c0_i32_1 = arith.constant 0 : i32
    return %c0_i32, %c0_i32_0 : i32, i32
  }
  func.func @transform_6(%arg0: i32) -> (i32, i32) {
    %c0_i32 = arith.constant 0 : i32
    %c0_i32_0 = arith.constant 0 : i32
    %c0_i32_1 = arith.constant 0 : i32
    return %c0_i32, %c0_i32_0 : i32, i32
  }
  func.func @transform_7(%arg0: i32) -> (i32, i32, i32) {
    %c0_i32 = arith.constant 0 : i32
    %c0_i32_0 = arith.constant 0 : i32
    %c0_i32_1 = arith.constant 0 : i32
    return %arg0, %c0_i32, %c0_i32_0 : i32, i32, i32
  }
}

</mosaic_0001>

<llo_original>
// kernel: nas_forward.1
$region0: #{nas_forward.1}
  #allocation0 [shape = 'u32[]', space=smem, size = 0x4, offset = 0x4, fixed_abs, tag = 'smem constant byte address 0x4 - core index']
  #allocation1 [shape = 'u32[144,128]{1,0:T(1,128)}', space=vmem, size = 0x12000, scoped, tag = 'internal scratch']
  %s0 = inlined_call_operand.vmem [shape: f32[2,8,128], index: 0, kind: input, shape index: {}]
  %s1 = inlined_call_operand.vmem [shape: bf16[256,256], index: 1, kind: input, shape index: {}]
  %s2 = inlined_call_operand.vmem [shape: f32[1,256], index: 2, kind: input, shape index: {}]
  %s3 = inlined_call_operand.vmem [shape: bf16[384,64], index: 3, kind: input, shape index: {}]
  %s4 = inlined_call_operand.vmem [shape: f32[1,64], index: 4, kind: input, shape index: {}]
  %s5 = inlined_call_operand.vmem [shape: bf16[512,10], index: 5, kind: input, shape index: {}]
  %s6 = inlined_call_operand.vmem [shape: f32[1,10], index: 6, kind: input, shape index: {}]
  %s7 = inlined_call_operand.hbm [shape: f32[2,1,10], index: 7, kind: output, shape index: {}]
  %s8 = sld [smem:[#allocation0]]
  $region61: #{nas_forward.1} parent=0
    _
  %s10 = ssub.s32 1, %s8
  %s11 = scalar_select 0, %s10, %s8
  $region1: #{nas_forward.1} parent=0
    #allocation2 [shape = 'u8[1024]{0}', space=vmem, size = 0x400, scoped, tag = 'output window, operand 0']
    #allocation3 [shape = 's32[2]{0}', space=sflag, size = 0x8, scoped, tag = 'scoped memory for nas_forward.1']
    %12 = vsyncpa [#allocation3], 0
    %s13 = scalar_lea.sflag [#allocation3], 1
    %14 = vsyncpa %s13, 0
    loop: start=0, step=1, limit=4
    $region2: #{nas_forward.1} parent=1 // loop_pre_header
      _
    $region3: #{nas_forward.1} parent=1 // loop_header
      %s16 = sphi 0, %s20
      %p17 = scmp.ge.s32.totalorder %s16, 4
      %s26 = sphi 0, %s28
      %s29 = sphi 0, %s26
      %s30 = sphi 0, %s29
      %s46 = sphi 0, %s30
      %s50 = sphi 0, %s50
      %s52 = sphi 0, %s50
      %s53 = sphi 0, %s52
      %s67 = sphi 0, %s53
      %s71 = sphi 0, %s71
      %s73 = sphi 0, %s71
      %s74 = sphi 0, %s73
      %s88 = sphi 0, %s74
      %s92 = sphi 0, %s92
      %s94 = sphi 0, %s92
      %s95 = sphi 0, %s94
      %s109 = sphi 0, %s95
      %s113 = sphi 0, %s113
      %s115 = sphi 0, %s113
      %s116 = sphi 0, %s115
      %s130 = sphi 0, %s116
      %s134 = sphi 0, %s134
      %s136 = sphi 0, %s134
      %s137 = sphi 0, %s136
      %s151 = sphi 0, %s137
      %s155 = sphi 0, %s155
      %s157 = sphi 0, %s155
      %s158 = sphi 0, %s157
      %s172 = sphi 0, %s158
      %s178 = sphi 0, %s180
      %s181 = sphi 0, %s178
      %s182 = sphi 0, %s181
      %s198 = sphi 0, %s182
    $region4: #{nas_forward.1} parent=1 // loop_header_branch
      %19 = sbr.rel (%p17) target = $region8
    $region5: #{nas_forward.1} parent=1 // loop_body
      %s21 = ssub.s32 %s16, 1
      %s22 = ssub.s32 %s16, 2
      %s23 = sadd.s32 %s16, 1
      %s24 = ssub.s32 %s16, %s23
      %p25 = scmp.eq.s32.totalorder %s24, 0
      %s27 = sadd.s32 %s26, 1
      %s28 = scalar_select %p25, %s26, %s27
      %p31 = pneg %p25
      %p32 = scmp.eq.s32.totalorder %s16, 1
      %p33 = por %p31, %p32
      %p34 = scmp.ne.s32.totalorder %s26, %s29
      %p35 = scmp.eq.s32.totalorder %s16, 0
      %p36 = por %p34, %p35
      %p37 = scmp.ne.s32.totalorder %s26, %s29
      %p38 = scmp.eq.s32.totalorder %s21, 1
      %p39 = por %p37, %p38
      %p40 = scmp.ne.s32.totalorder %s29, %s30
      %p41 = scmp.eq.s32.totalorder %s21, 0
      %p42 = por %p40, %p41
      %p43 = scmp.ne.s32.totalorder %s29, %s30
      %p44 = scmp.eq.s32.totalorder %s22, 1
      %p45 = por %p43, %p44
      %p47 = scmp.ne.s32.totalorder %s30, %s46
      %p48 = scmp.eq.s32.totalorder %s22, 0
      %p49 = por %p47, %p48
      %s51 = sadd.s32 %s50, 1
      %p54 = scmp.eq.s32.totalorder %s16, 1
      %p55 = scmp.ne.s32.totalorder %s50, %s52
      %p56 = scmp.eq.s32.totalorder %s16, 0
      %p57 = por %p55, %p56
      %p58 = scmp.ne.s32.totalorder %s50, %s52
      %p59 = scmp.eq.s32.totalorder %s21, 1
      %p60 = por %p58, %p59
      %p61 = scmp.ne.s32.totalorder %s52, %s53
      %p62 = scmp.eq.s32.totalorder %s21, 0
      %p63 = por %p61, %p62
      %p64 = scmp.ne.s32.totalorder %s52, %s53
      %p65 = scmp.eq.s32.totalorder %s22, 1
      %p66 = por %p64, %p65
      %p68 = scmp.ne.s32.totalorder %s53, %s67
      %p69 = scmp.eq.s32.totalorder %s22, 0
      %p70 = por %p68, %p69
      %s72 = sadd.s32 %s71, 1
      %p75 = scmp.eq.s32.totalorder %s16, 1
      %p76 = scmp.ne.s32.totalorder %s71, %s73
      %p77 = scmp.eq.s32.totalorder %s16, 0
      %p78 = por %p76, %p77
      %p79 = scmp.ne.s32.totalorder %s71, %s73
      %p80 = scmp.eq.s32.totalorder %s21, 1
      %p81 = por %p79, %p80
      %p82 = scmp.ne.s32.totalorder %s73, %s74
      %p83 = scmp.eq.s32.totalorder %s21, 0
      %p84 = por %p82, %p83
      %p85 = scmp.ne.s32.totalorder %s73, %s74
      %p86 = scmp.eq.s32.totalorder %s22, 1
      %p87 = por %p85, %p86
      %p89 = scmp.ne.s32.totalorder %s74, %s88
      %p90 = scmp.eq.s32.totalorder %s22, 0
      %p91 = por %p89, %p90
      %s93 = sadd.s32 %s92, 1
      %p96 = scmp.eq.s32.totalorder %s16, 1
      %p97 = scmp.ne.s32.totalorder %s92, %s94
      %p98 = scmp.eq.s32.totalorder %s16, 0
      %p99 = por %p97, %p98
      %p100 = scmp.ne.s32.totalorder %s92, %s94
      %p101 = scmp.eq.s32.totalorder %s21, 1
      %p102 = por %p100, %p101
      %p103 = scmp.ne.s32.totalorder %s94, %s95
      %p104 = scmp.eq.s32.totalorder %s21, 0
      %p105 = por %p103, %p104
      %p106 = scmp.ne.s32.totalorder %s94, %s95
      %p107 = scmp.eq.s32.totalorder %s22, 1
      %p108 = por %p106, %p107
      %p110 = scmp.ne.s32.totalorder %s95, %s109
      %p111 = scmp.eq.s32.totalorder %s22, 0
      %p112 = por %p110, %p111
      %s114 = sadd.s32 %s113, 1
      %p117 = scmp.eq.s32.totalorder %s16, 1
      %p118 = scmp.ne.s32.totalorder %s113, %s115
      %p119 = scmp.eq.s32.totalorder %s16, 0
      %p120 = por %p118, %p119
      %p121 = scmp.ne.s32.totalorder %s113, %s115
      %p122 = scmp.eq.s32.totalorder %s21, 1
      %p123 = por %p121, %p122
      %p124 = scmp.ne.s32.totalorder %s115, %s116
      %p125 = scmp.eq.s32.totalorder %s21, 0
      %p126 = por %p124, %p125
      %p127 = scmp.ne.s32.totalorder %s115, %s116
      %p128 = scmp.eq.s32.totalorder %s22, 1
      %p129 = por %p127, %p128
      %p131 = scmp.ne.s32.totalorder %s116, %s130
      %p132 = scmp.eq.s32.totalorder %s22, 0
      %p133 = por %p131, %p132
      %s135 = sadd.s32 %s134, 1
      %p138 = scmp.eq.s32.totalorder %s16, 1
      %p139 = scmp.ne.s32.totalorder %s134, %s136
      %p140 = scmp.eq.s32.totalorder %s16, 0
      %p141 = por %p139, %p140
      %p142 = scmp.ne.s32.totalorder %s134, %s136
      %p143 = scmp.eq.s32.totalorder %s21, 1
      %p144 = por %p142, %p143
      %p145 = scmp.ne.s32.totalorder %s136, %s137
      %p146 = scmp.eq.s32.totalorder %s21, 0
      %p147 = por %p145, %p146
      %p148 = scmp.ne.s32.totalorder %s136, %s137
      %p149 = scmp.eq.s32.totalorder %s22, 1
      %p150 = por %p148, %p149
      %p152 = scmp.ne.s32.totalorder %s137, %s151
      %p153 = scmp.eq.s32.totalorder %s22, 0
      %p154 = por %p152, %p153
      %s156 = sadd.s32 %s155, 1
      %p159 = scmp.eq.s32.totalorder %s16, 1
      %p160 = scmp.ne.s32.totalorder %s155, %s157
      %p161 = scmp.eq.s32.totalorder %s16, 0
      %p162 = por %p160, %p161
      %p163 = scmp.ne.s32.totalorder %s155, %s157
      %p164 = scmp.eq.s32.totalorder %s21, 1
      %p165 = por %p163, %p164
      %p166 = scmp.ne.s32.totalorder %s157, %s158
      %p167 = scmp.eq.s32.totalorder %s21, 0
      %p168 = por %p166, %p167
      %p169 = scmp.ne.s32.totalorder %s157, %s158
      %p170 = scmp.eq.s32.totalorder %s22, 1
      %p171 = por %p169, %p170
      %p173 = scmp.ne.s32.totalorder %s158, %s172
      %p174 = scmp.eq.s32.totalorder %s22, 0
      %p175 = por %p173, %p174
      %s176 = ssub.s32 %s16, %s23
      %p177 = scmp.eq.s32.totalorder %s176, 0
      %s179 = sadd.s32 %s178, 1
      %s180 = scalar_select %p177, %s178, %s179
      %p183 = pneg %p177
      %p184 = scmp.eq.s32.totalorder %s16, 1
      %p185 = por %p183, %p184
      %p186 = scmp.ne.s32.totalorder %s178, %s181
      %p187 = scmp.eq.s32.totalorder %s16, 0
      %p188 = por %p186, %p187
      %p189 = scmp.ne.s32.totalorder %s178, %s181
      %p190 = scmp.eq.s32.totalorder %s21, 1
      %p191 = por %p189, %p190
      %p192 = scmp.ne.s32.totalorder %s181, %s182
      %p193 = scmp.eq.s32.totalorder %s21, 0
      %p194 = por %p192, %p193
      %p195 = scmp.ne.s32.totalorder %s181, %s182
      %p196 = scmp.eq.s32.totalorder %s22, 1
      %p197 = por %p195, %p196
      %p199 = scmp.ne.s32.totalorder %s182, %s198
      %p200 = scmp.eq.s32.totalorder %s22, 0
      %p201 = por %p199, %p200
      %p202 = scmp.le.s32.totalorder 1, %s16
      %p203 = scmp.lt.s32.totalorder %s16, 3
      %p204 = pnand %p202, %p203
      %p205 = pneg %p204
      // Predicated region
      $region9: #{nas_forward.1} parent=5 // pred_check
        _
      $region10: #{nas_forward.1} parent=5 // pred_check_branch
        %207 = sbr.rel (%p204) target = $region12
      $region11: #{nas_forward.1} parent=5 // pred_region
        %s208 = ssub.s32 %s16, 1
        // Predicated region
        $region13: #{nas_forward.1} parent=11 // pred_check
          %p209 = pneg %p63
        $region14: #{nas_forward.1} parent=11 // pred_check_branch
          %211 = sbr.rel (%p209) target = $region16
        $region15: #{nas_forward.1} parent=11 // pred_region
          _
        $region16: #{nas_forward.1} parent=11 // pred_fallthru
          _
        // Predicated region
        $region17: #{nas_forward.1} parent=11 // pred_check
          %p212 = pneg %p84
        $region18: #{nas_forward.1} parent=11 // pred_check_branch
          %214 = sbr.rel (%p212) target = $region20
        $region19: #{nas_forward.1} parent=11 // pred_region
          _
        $region20: #{nas_forward.1} parent=11 // pred_fallthru
          _
        // Predicated region
        $region21: #{nas_forward.1} parent=11 // pred_check
          %p215 = pneg %p105
        $region22: #{nas_forward.1} parent=11 // pred_check_branch
          %217 = sbr.rel (%p215) target = $region24
        $region23: #{nas_forward.1} parent=11 // pred_region
          _
        $region24: #{nas_forward.1} parent=11 // pred_fallthru
          _
        // Predicated region
        $region25: #{nas_forward.1} parent=11 // pred_check
          %p218 = pneg %p126
        $region26: #{nas_forward.1} parent=11 // pred_check_branch
          %220 = sbr.rel (%p218) target = $region28
        $region27: #{nas_forward.1} parent=11 // pred_region
          _
        $region28: #{nas_forward.1} parent=11 // pred_fallthru
          _
        // Predicated region
        $region29: #{nas_forward.1} parent=11 // pred_check
          %p221 = pneg %p147
        $region30: #{nas_forward.1} parent=11 // pred_check_branch
          %223 = sbr.rel (%p221) target = $region32
        $region31: #{nas_forward.1} parent=11 // pred_region
          _
        $region32: #{nas_forward.1} parent=11 // pred_fallthru
          _
        // Predicated region
        $region33: #{nas_forward.1} parent=11 // pred_check
          %p224 = pneg %p168
        $region34: #{nas_forward.1} parent=11 // pred_check_branch
          %226 = sbr.rel (%p224) target = $region36
        $region35: #{nas_forward.1} parent=11 // pred_region
          _
        $region36: #{nas_forward.1} parent=11 // pred_fallthru
          _
      $region12: #{nas_forward.1} parent=5 // pred_fallthru
        _
      %p227 = scmp.lt.s32.totalorder %s16, 2
      // Predicated region
      $region37: #{nas_forward.1} parent=5 // pred_check
        %p228 = pneg %p227
      $region38: #{nas_forward.1} parent=5 // pred_check_branch
        %230 = sbr.rel (%p228) target = $region40
      $region39: #{nas_forward.1} parent=5 // pred_region
        // Predicated region
        $region41: #{nas_forward.1} parent=39 // pred_check
          %p231 = pneg %p36
        $region42: #{nas_forward.1} parent=39 // pred_check_branch
          %233 = sbr.rel (%p231) target = $region44
        $region43: #{nas_forward.1} parent=39 // pred_region
          %p234 = scmp.lt.s32.totalorder %s16, 1
          %s235 = scalar_select %p234, %s16, 1
          %s236 = smul.addr %s235, 8
          %s237 = scalar_lea.vmem %s0, %s236
        $region44: #{nas_forward.1} parent=39 // pred_fallthru
          _
      $region40: #{nas_forward.1} parent=5 // pred_fallthru
        _
      %p238 = scmp.le.s32.totalorder 1, %s16
      %p239 = scmp.lt.s32.totalorder %s16, 3
      %p240 = pnand %p238, %p239
      %p241 = pneg %p240
      // Predicated region
      $region45: #{nas_forward.1} parent=5 // pred_check
        _
      $region46: #{nas_forward.1} parent=5 // pred_check_branch
        %243 = sbr.rel (%p240) target = $region48
      $region47: #{nas_forward.1} parent=5 // pred_region
        %s244 = ssub.s32 %s16, 1
        %p245 = scmp.lt.s32.totalorder %s21, 1
        %s246 = scalar_select %p245, %s21, 1
        %s247 = smul.addr %s246, 8
        %s248 = scalar_lea.vmem %s0, %s247
        %p249 = pneg %p42
        %p250 = pneg %p39
        %p251 = pneg %p63
        %p252 = pneg %p60
        %p253 = pneg %p84
        %p254 = pneg %p81
        %p255 = pneg %p105
        %p256 = pneg %p102
        %p257 = pneg %p126
        %p258 = pneg %p123
        %p259 = pneg %p147
        %p260 = pneg %p144
        %p261 = pneg %p168
        %p262 = pneg %p165
        %p263 = pneg %p194
        %p264 = pneg %p191
        %s265 = sand.u32 %s181, 1
        %s266 = scalar_lea.sflag [#allocation3], %s265
        %s267 = sand.u32 %s181, 1
        %s268 = scalar_lea.vmem [#allocation2], %s267
        %p269 = scmp.lt.s32.totalorder %s21, 1
        %s270 = scalar_select %p269, %s21, 1
        %s271 = smul.addr %s270, 8
        %s272 = scalar_lea.vmem %s0, %s271
        %v274 = vld [vmem:[%s272] sm:$0xff]
        %v275 = vlaneseq
        %v276 = vshrl.u32 %v275, 7
        %vm277 = vcmp.ge.s32.totalorder %v276, 1
        %v278 = vrot.slane %v274, 7
        %v279 = vsel %vm277, %v278, 0.0
        %vm280 = vcmp.lt.s32.totalorder %v276, 7
        %v281 = vrot.slane %v274, 1
        %v282 = vsel %vm280, %v281, 0.0
        %284 = vrot.lane.b32.xlu0 %v279, 64
        %v285 = vpop.permute.xlu0 %284
        %288 = vrot.lane.b32.xlu0 %v274, 64
        %v289 = vpop.permute.xlu0 %288
        %292 = vrot.lane.b32.xlu0 %v282, 64
        %v293 = vpop.permute.xlu0 %292
        %vm295 = vcmask 523264
        %v296 = vsel %vm295, %v285, %v289
        %v297 = vsel %vm295, %v289, %v293
        %v298 = vpack.c.bf16 %v296, %v296
        %v299 = vpack.c.bf16 %v297, %v297
        %v300 = vld [vmem:[%s1] sm:$0xff]
        %v301 = vld [vmem:[%s1 + $0x8] sm:$0xff]
        %v302 = vld [vmem:[%s1 + $0x10] sm:$0xff]
        %v303 = vld [vmem:[%s1 + $0x18] sm:$0xff]
        %v304 = vld [vmem:[%s1 + $0x20] sm:$0xff]
        %v305 = vld [vmem:[%s1 + $0x28] sm:$0xff]
        %v306 = vld [vmem:[%s1 + $0x30] sm:$0xff]
        %v307 = vld [vmem:[%s1 + $0x38] sm:$0xff]
        %v308 = vld [vmem:[%s1 + $0x40] sm:$0xff]
        %v309 = vld [vmem:[%s1 + $0x48] sm:$0xff]
        %v310 = vld [vmem:[%s1 + $0x50] sm:$0xff]
        %v311 = vld [vmem:[%s1 + $0x58] sm:$0xff]
        %v312 = vld [vmem:[%s1 + $0x60] sm:$0xff]
        %v313 = vld [vmem:[%s1 + $0x68] sm:$0xff]
        %v314 = vld [vmem:[%s1 + $0x70] sm:$0xff]
        %v315 = vld [vmem:[%s1 + $0x78] sm:$0xff]
        %v316 = vld [vmem:[%s1 + $0x80] sm:$0xff]
        %v317 = vld [vmem:[%s1 + $0x88] sm:$0xff]
        %v318 = vld [vmem:[%s1 + $0x90] sm:$0xff]
        %v319 = vld [vmem:[%s1 + $0x98] sm:$0xff]
        %v320 = vld [vmem:[%s1 + $0xa0] sm:$0xff]
        %v321 = vld [vmem:[%s1 + $0xa8] sm:$0xff]
        %v322 = vld [vmem:[%s1 + $0xb0] sm:$0xff]
        %v323 = vld [vmem:[%s1 + $0xb8] sm:$0xff]
        %v324 = vld [vmem:[%s1 + $0xc0] sm:$0xff]
        %v325 = vld [vmem:[%s1 + $0xc8] sm:$0xff]
        %v326 = vld [vmem:[%s1 + $0xd0] sm:$0xff]
        %v327 = vld [vmem:[%s1 + $0xd8] sm:$0xff]
        %v328 = vld [vmem:[%s1 + $0xe0] sm:$0xff]
        %v329 = vld [vmem:[%s1 + $0xe8] sm:$0xff]
        %v330 = vld [vmem:[%s1 + $0xf0] sm:$0xff]
        %v331 = vld [vmem:[%s1 + $0xf8] sm:$0xff]
        %v332 = vld [vmem:[%s2] sm:$0x3]
        %v334 = vlaneseq
        %v335 = vshrl.u32 %v334, 7
        %v336 = vsub.s32 0, %v335
        %v337 = vrot.slane %v332, %v336
        %v338 = vlaneseq
        %v339 = vshrl.u32 %v338, 7
        %v340 = vsub.s32 1, %v339
        %v341 = vrot.slane %v332, %v340
        %v376 = vunpack.c.l.b16 %v300
        %v377 = vunpack.c.h.b16 %v300
        %v378 = vunpack.c.l.b16 %v301
        %v379 = vunpack.c.h.b16 %v301
        %v380 = vunpack.c.l.b16 %v302
        %v381 = vunpack.c.h.b16 %v302
        %v382 = vunpack.c.l.b16 %v303
        %v383 = vunpack.c.h.b16 %v303
        %v384 = vunpack.c.l.b16 %v304
        %v385 = vunpack.c.h.b16 %v304
        %v386 = vunpack.c.l.b16 %v305
        %v387 = vunpack.c.h.b16 %v305
        %v388 = vunpack.c.l.b16 %v306
        %v389 = vunpack.c.h.b16 %v306
        %v390 = vunpack.c.l.b16 %v307
        %v391 = vunpack.c.h.b16 %v307
        %v392 = vunpack.c.l.b16 %v308
        %v393 = vunpack.c.h.b16 %v308
        %v394 = vunpack.c.l.b16 %v309
        %v395 = vunpack.c.h.b16 %v309
        %v396 = vunpack.c.l.b16 %v310
        %v397 = vunpack.c.h.b16 %v310
        %v398 = vunpack.c.l.b16 %v311
        %v399 = vunpack.c.h.b16 %v311
        %v400 = vunpack.c.l.b16 %v312
        %v401 = vunpack.c.h.b16 %v312
        %v402 = vunpack.c.l.b16 %v313
        %v403 = vunpack.c.h.b16 %v313
        %v404 = vunpack.c.l.b16 %v314
        %v405 = vunpack.c.h.b16 %v314
        %v406 = vunpack.c.l.b16 %v315
        %v407 = vunpack.c.h.b16 %v315
        %v408 = vunpack.c.l.b16 %v316
        %v409 = vunpack.c.h.b16 %v316
        %v410 = vunpack.c.l.b16 %v317
        %v411 = vunpack.c.h.b16 %v317
        %v412 = vunpack.c.l.b16 %v318
        %v413 = vunpack.c.h.b16 %v318
        %v414 = vunpack.c.l.b16 %v319
        %v415 = vunpack.c.h.b16 %v319
        %v416 = vunpack.c.l.b16 %v320
        %v417 = vunpack.c.h.b16 %v320
        %v418 = vunpack.c.l.b16 %v321
        %v419 = vunpack.c.h.b16 %v321
        %v420 = vunpack.c.l.b16 %v322
        %v421 = vunpack.c.h.b16 %v322
        %v422 = vunpack.c.l.b16 %v323
        %v423 = vunpack.c.h.b16 %v323
        %v424 = vunpack.c.l.b16 %v324
        %v425 = vunpack.c.h.b16 %v324
        %v426 = vunpack.c.l.b16 %v325
        %v427 = vunpack.c.h.b16 %v325
        %v428 = vunpack.c.l.b16 %v326
        %v429 = vunpack.c.h.b16 %v326
        %v430 = vunpack.c.l.b16 %v327
        %v431 = vunpack.c.h.b16 %v327
        %v432 = vunpack.c.l.b16 %v328
        %v433 = vunpack.c.h.b16 %v328
        %v434 = vunpack.c.l.b16 %v329
        %v435 = vunpack.c.h.b16 %v329
        %v436 = vunpack.c.l.b16 %v330
        %v437 = vunpack.c.h.b16 %v330
        %v438 = vunpack.c.l.b16 %v331
        %v439 = vunpack.c.h.b16 %v331
        %v440 = vpack.c.b16 %v378, %v376
        %v441 = vpack.c.b16 %v379, %v377
        %v442 = vpack.c.b16 %v382, %v380
        %v443 = vpack.c.b16 %v383, %v381
        %v444 = vpack.c.b16 %v386, %v384
        %v445 = vpack.c.b16 %v387, %v385
        %v446 = vpack.c.b16 %v390, %v388
        %v447 = vpack.c.b16 %v391, %v389
        %v448 = vpack.c.b16 %v394, %v392
        %v449 = vpack.c.b16 %v395, %v393
        %v450 = vpack.c.b16 %v398, %v396
        %v451 = vpack.c.b16 %v399, %v397
        %v452 = vpack.c.b16 %v402, %v400
        %v453 = vpack.c.b16 %v403, %v401
        %v454 = vpack.c.b16 %v406, %v404
        %v455 = vpack.c.b16 %v407, %v405
        %v456 = vpack.c.b16 %v410, %v408
        %v457 = vpack.c.b16 %v411, %v409
        %v458 = vpack.c.b16 %v414, %v412
        %v459 = vpack.c.b16 %v415, %v413
        %v460 = vpack.c.b16 %v418, %v416
        %v461 = vpack.c.b16 %v419, %v417
        %v462 = vpack.c.b16 %v422, %v420
        %v463 = vpack.c.b16 %v423, %v421
        %v464 = vpack.c.b16 %v426, %v424
        %v465 = vpack.c.b16 %v427, %v425
        %v466 = vpack.c.b16 %v430, %v428
        %v467 = vpack.c.b16 %v431, %v429
        %v468 = vpack.c.b16 %v434, %v432
        %v469 = vpack.c.b16 %v435, %v433
        %v470 = vpack.c.b16 %v438, %v436
        %v471 = vpack.c.b16 %v439, %v437
        %504 = vmatprep.subr.bf16.mxu0 %v455
        %505 = vmatpush1.bf16.msra.mxu0 %v454
        %506 = vmatprep.subr.bf16.mxu0 %v453
        %507 = vmatpush1.bf16.msra.mxu0 %v452
        %508 = vmatprep.subr.bf16.mxu0 %v451
        %509 = vmatpush1.bf16.msra.mxu0 %v450
        %510 = vmatprep.subr.bf16.mxu0 %v449
        %511 = vmatpush1.bf16.msra.mxu0 %v448
        %512 = vmatprep.subr.bf16.mxu0 %v447
        %513 = vmatpush1.bf16.msra.mxu0 %v446
        %514 = vmatprep.subr.bf16.mxu0 %v445
        %515 = vmatpush1.bf16.msra.mxu0 %v444
        %516 = vmatprep.subr.bf16.mxu0 %v443
        %517 = vmatpush1.bf16.msra.mxu0 %v442
        %518 = vmatprep.subr.bf16.mxu0 %v441
        %519 = vmatpush1.bf16.msra.mxu0 %v440
        %520 = vmatprep.subr.bf16.mxu0 %v471
        %521 = vmatpush2.bf16.msra.mxu0 %v470
        %522 = vmatprep.subr.bf16.mxu0 %v469
        %523 = vmatpush2.bf16.msra.mxu0 %v468
        %524 = vmatprep.subr.bf16.mxu0 %v467
        %525 = vmatpush2.bf16.msra.mxu0 %v466
        %526 = vmatprep.subr.bf16.mxu0 %v465
        %527 = vmatpush2.bf16.msra.mxu0 %v464
        %528 = vmatprep.subr.bf16.mxu0 %v463
        %529 = vmatpush2.bf16.msra.mxu0 %v462
        %530 = vmatprep.subr.bf16.mxu0 %v461
        %531 = vmatpush2.bf16.msra.mxu0 %v460
        %532 = vmatprep.subr.bf16.mxu0 %v459
        %533 = vmatpush2.bf16.msra.mxu0 %v458
        %534 = vmatprep.subr.bf16.mxu0 %v457
        %535 = vmatpush2.bf16.msra.mxu0 %v456
        %536 = vmatprep.mubr.bf16.mxu0 %v299
        %537 = vmatmul.mubr.bf16.gmra.mxu0 %v298
        %v538 = vpop.f32.mrf.mxu0
        %v539 = vadd.f32 %v337, %v538
        %v540 = vpop.f32.mrf.mxu0
        %v541 = vadd.f32 %v341, %v540
        %v542 = vpop.f32.mrf.mxu0
        %v543 = vpop.f32.mrf.mxu0
        %544 = vdwg.mxu0
        %v545 = vmax.f32 %v539, 0.0
        %v546 = vmax.f32 %v541, 0.0
        %v547 = vrot.slane %v546, 7
        %v548 = vsel %vm277, %v547, 0.0
        %v549 = vpack.c.bf16 %v548, %v548
        %v550 = vpack.c.bf16 %v545, %v545
        %v551 = vpack.c.bf16 %v546, %v546
        %v552 = vld [vmem:[%s3] sm:$0xf]
        %v553 = vld [vmem:[%s3 + $0x4] sm:$0xf]
        %v554 = vld [vmem:[%s3 + $0x8] sm:$0xf]
        %v555 = vld [vmem:[%s3 + $0xc] sm:$0xf]
        %v556 = vld [vmem:[%s3 + $0x10] sm:$0xf]
        %v557 = vld [vmem:[%s3 + $0x14] sm:$0xf]
        %v558 = vld [vmem:[%s3 + $0x18] sm:$0xf]
        %v559 = vld [vmem:[%s3 + $0x1c] sm:$0xf]
        %v560 = vld [vmem:[%s3 + $0x20] sm:$0xf]
        %v561 = vld [vmem:[%s3 + $0x24] sm:$0xf]
        %v562 = vld [vmem:[%s3 + $0x28] sm:$0xf]
        %v563 = vld [vmem:[%s3 + $0x2c] sm:$0xf]
        %v564 = vld [vmem:[%s3 + $0x30] sm:$0xf]
        %v565 = vld [vmem:[%s3 + $0x34] sm:$0xf]
        %v566 = vld [vmem:[%s3 + $0x38] sm:$0xf]
        %v567 = vld [vmem:[%s3 + $0x3c] sm:$0xf]
        %v568 = vld [vmem:[%s3 + $0x40] sm:$0xf]
        %v569 = vld [vmem:[%s3 + $0x44] sm:$0xf]
        %v570 = vld [vmem:[%s3 + $0x48] sm:$0xf]
        %v571 = vld [vmem:[%s3 + $0x4c] sm:$0xf]
        %v572 = vld [vmem:[%s3 + $0x50] sm:$0xf]
        %v573 = vld [vmem:[%s3 + $0x54] sm:$0xf]
        %v574 = vld [vmem:[%s3 + $0x58] sm:$0xf]
        %v575 = vld [vmem:[%s3 + $0x5c] sm:$0xf]
        %v576 = vld [vmem:[%s3 + $0x60] sm:$0xf]
        %v577 = vld [vmem:[%s3 + $0x64] sm:$0xf]
        %v578 = vld [vmem:[%s3 + $0x68] sm:$0xf]
        %v579 = vld [vmem:[%s3 + $0x6c] sm:$0xf]
        %v580 = vld [vmem:[%s3 + $0x70] sm:$0xf]
        %v581 = vld [vmem:[%s3 + $0x74] sm:$0xf]
        %v582 = vld [vmem:[%s3 + $0x78] sm:$0xf]
        %v583 = vld [vmem:[%s3 + $0x7c] sm:$0xf]
        %v584 = vld [vmem:[%s3 + $0x80] sm:$0xf]
        %v585 = vld [vmem:[%s3 + $0x84] sm:$0xf]
        %v586 = vld [vmem:[%s3 + $0x88] sm:$0xf]
        %v587 = vld [vmem:[%s3 + $0x8c] sm:$0xf]
        %v588 = vld [vmem:[%s3 + $0x90] sm:$0xf]
        %v589 = vld [vmem:[%s3 + $0x94] sm:$0xf]
        %v590 = vld [vmem:[%s3 + $0x98] sm:$0xf]
        %v591 = vld [vmem:[%s3 + $0x9c] sm:$0xf]
        %v592 = vld [vmem:[%s3 + $0xa0] sm:$0xf]
        %v593 = vld [vmem:[%s3 + $0xa4] sm:$0xf]
        %v594 = vld [vmem:[%s3 + $0xa8] sm:$0xf]
        %v595 = vld [vmem:[%s3 + $0xac] sm:$0xf]
        %v596 = vld [vmem:[%s3 + $0xb0] sm:$0xf]
        %v597 = vld [vmem:[%s3 + $0xb4] sm:$0xf]
        %v598 = vld [vmem:[%s3 + $0xb8] sm:$0xf]
        %v599 = vld [vmem:[%s3 + $0xbc] sm:$0xf]
        %v600 = vld [vmem:[%s4] sm:$0x1]
        %v602 = vlaneseq
        %v603 = vshrl.u32 %v602, 7
        %v604 = vsub.s32 0, %v603
        %v605 = vrot.slane %v600, %v604
        %v655 = vunpack.c.l.b16 %v552
        %v656 = vunpack.c.l.b16 %v553
        %v657 = vunpack.c.l.b16 %v554
        %v658 = vunpack.c.l.b16 %v555
        %v659 = vunpack.c.l.b16 %v556
        %v660 = vunpack.c.l.b16 %v557
        %v661 = vunpack.c.l.b16 %v558
        %v662 = vunpack.c.l.b16 %v559
        %v663 = vunpack.c.l.b16 %v560
        %v664 = vunpack.c.l.b16 %v561
        %v665 = vunpack.c.l.b16 %v562
        %v666 = vunpack.c.l.b16 %v563
        %v667 = vunpack.c.l.b16 %v564
        %v668 = vunpack.c.l.b16 %v565
        %v669 = vunpack.c.l.b16 %v566
        %v670 = vunpack.c.l.b16 %v567
        %v671 = vunpack.c.l.b16 %v568
        %v672 = vunpack.c.l.b16 %v569
        %v673 = vunpack.c.l.b16 %v570
        %v674 = vunpack.c.l.b16 %v571
        %v675 = vunpack.c.l.b16 %v572
        %v676 = vunpack.c.l.b16 %v573
        %v677 = vunpack.c.l.b16 %v574
        %v678 = vunpack.c.l.b16 %v575
        %v679 = vunpack.c.l.b16 %v576
        %v680 = vunpack.c.l.b16 %v577
        %v681 = vunpack.c.l.b16 %v578
        %v682 = vunpack.c.l.b16 %v579
        %v683 = vunpack.c.l.b16 %v580
        %v684 = vunpack.c.l.b16 %v581
        %v685 = vunpack.c.l.b16 %v582
        %v686 = vunpack.c.l.b16 %v583
        %v687 = vunpack.c.l.b16 %v584
        %v688 = vunpack.c.l.b16 %v585
        %v689 = vunpack.c.l.b16 %v586
        %v690 = vunpack.c.l.b16 %v587
        %v691 = vunpack.c.l.b16 %v588
        %v692 = vunpack.c.l.b16 %v589
        %v693 = vunpack.c.l.b16 %v590
        %v694 = vunpack.c.l.b16 %v591
        %v695 = vunpack.c.l.b16 %v592
        %v696 = vunpack.c.l.b16 %v593
        %v697 = vunpack.c.l.b16 %v594
        %v698 = vunpack.c.l.b16 %v595
        %v699 = vunpack.c.l.b16 %v596
        %v700 = vunpack.c.l.b16 %v597
        %v701 = vunpack.c.l.b16 %v598
        %v702 = vunpack.c.l.b16 %v599
        %v703 = vpack.c.b16 %v656, %v655
        %v704 = vpack.c.b16 %v658, %v657
        %v705 = vpack.c.b16 %v660, %v659
        %v706 = vpack.c.b16 %v662, %v661
        %v707 = vpack.c.b16 %v664, %v663
        %v708 = vpack.c.b16 %v666, %v665
        %v709 = vpack.c.b16 %v668, %v667
        %v710 = vpack.c.b16 %v670, %v669
        %v711 = vpack.c.b16 %v672, %v671
        %v712 = vpack.c.b16 %v674, %v673
        %v713 = vpack.c.b16 %v676, %v675
        %v714 = vpack.c.b16 %v678, %v677
        %v715 = vpack.c.b16 %v680, %v679
        %v716 = vpack.c.b16 %v682, %v681
        %v717 = vpack.c.b16 %v684, %v683
        %v718 = vpack.c.b16 %v686, %v685
        %v719 = vpack.c.b16 %v688, %v687
        %v720 = vpack.c.b16 %v690, %v689
        %v721 = vpack.c.b16 %v692, %v691
        %v722 = vpack.c.b16 %v694, %v693
        %v723 = vpack.c.b16 %v696, %v695
        %v724 = vpack.c.b16 %v698, %v697
        %v725 = vpack.c.b16 %v700, %v699
        %v726 = vpack.c.b16 %v702, %v701
        %751 = vmatprep.subr.bf16.mxu0 0
        %752 = vmatpush1.bf16.msra.mxu0 %v710
        %753 = vmatprep.subr.bf16.mxu0 0
        %754 = vmatpush1.bf16.msra.mxu0 %v709
        %755 = vmatprep.subr.bf16.mxu0 0
        %756 = vmatpush1.bf16.msra.mxu0 %v708
        %757 = vmatprep.subr.bf16.mxu0 0
        %758 = vmatpush1.bf16.msra.mxu0 %v707
        %759 = vmatprep.subr.bf16.mxu0 0
        %760 = vmatpush1.bf16.msra.mxu0 %v706
        %761 = vmatprep.subr.bf16.mxu0 0
        %762 = vmatpush1.bf16.msra.mxu0 %v705
        %763 = vmatprep.subr.bf16.mxu0 0
        %764 = vmatpush1.bf16.msra.mxu0 %v704
        %765 = vmatprep.subr.bf16.mxu0 0
        %766 = vmatpush1.bf16.msra.mxu0 %v703
        %767 = vmatprep.subr.bf16.mxu0 0
        %768 = vmatpush2.bf16.msra.mxu0 %v718
        %769 = vmatprep.subr.bf16.mxu0 0
        %770 = vmatpush2.bf16.msra.mxu0 %v717
        %771 = vmatprep.subr.bf16.mxu0 0
        %772 = vmatpush2.bf16.msra.mxu0 %v716
        %773 = vmatprep.subr.bf16.mxu0 0
        %774 = vmatpush2.bf16.msra.mxu0 %v715
        %775 = vmatprep.subr.bf16.mxu0 0
        %776 = vmatpush2.bf16.msra.mxu0 %v714
        %777 = vmatprep.subr.bf16.mxu0 0
        %778 = vmatpush2.bf16.msra.mxu0 %v713
        %779 = vmatprep.subr.bf16.mxu0 0
        %780 = vmatpush2.bf16.msra.mxu0 %v712
        %781 = vmatprep.subr.bf16.mxu0 0
        %782 = vmatpush2.bf16.msra.mxu0 %v711
        %783 = vmatprep.mubr.bf16.mxu0 %v550
        %784 = vmatmul.mubr.bf16.gmra.mxu0 %v549
        %v785 = vpop.f32.mrf.mxu0
        %v786 = vadd.f32 %v605, %v785
        %v787 = vpop.f32.mrf.mxu0
        %v788 = vpop.f32.mrf.mxu0
        %v789 = vpop.f32.mrf.mxu0
        %790 = vdwg.mxu0
        %791 = vmatprep.subr.bf16.mxu0 0
        %792 = vmatpush1.bf16.msra.mxu0 %v726
        %793 = vmatprep.subr.bf16.mxu0 0
        %794 = vmatpush1.bf16.msra.mxu0 %v725
        %795 = vmatprep.subr.bf16.mxu0 0
        %796 = vmatpush1.bf16.msra.mxu0 %v724
        %797 = vmatprep.subr.bf16.mxu0 0
        %798 = vmatpush1.bf16.msra.mxu0 %v723
        %799 = vmatprep.subr.bf16.mxu0 0
        %800 = vmatpush1.bf16.msra.mxu0 %v722
        %801 = vmatprep.subr.bf16.mxu0 0
        %802 = vmatpush1.bf16.msra.mxu0 %v721
        %803 = vmatprep.subr.bf16.mxu0 0
        %804 = vmatpush1.bf16.msra.mxu0 %v720
        %805 = vmatprep.subr.bf16.mxu0 0
        %806 = vmatpush1.bf16.msra.mxu0 %v719
        %807 = vmatprep.subr.bf16.mxu0 0
        %808 = vmatpush2.bf16.msra.mxu0 0
        %809 = vmatprep.subr.bf16.mxu0 0
        %810 = vmatpush2.bf16.msra.mxu0 0
        %811 = vmatprep.subr.bf16.mxu0 0
        %812 = vmatpush2.bf16.msra.mxu0 0
        %813 = vmatprep.subr.bf16.mxu0 0
        %814 = vmatpush2.bf16.msra.mxu0 0
        %815 = vmatprep.subr.bf16.mxu0 0
        %816 = vmatpush2.bf16.msra.mxu0 0
        %817 = vmatprep.subr.bf16.mxu0 0
        %818 = vmatpush2.bf16.msra.mxu0 0
        %819 = vmatprep.subr.bf16.mxu0 0
        %820 = vmatpush2.bf16.msra.mxu0 0
        %821 = vmatprep.subr.bf16.mxu0 0
        %822 = vmatpush2.bf16.msra.mxu0 0
        %823 = vmatprep.mubr.bf16.mxu0 0
        %824 = vmatmul.mubr.bf16.gmra.mxu0 %v551
        %v825 = vpop.f32.mrf.mxu0
        %v826 = vadd.f32 %v786, %v825
        %v827 = vpop.f32.mrf.mxu0
        %v828 = vpop.f32.mrf.mxu0
        %v829 = vpop.f32.mrf.mxu0
        %830 = vdwg.mxu0
        %v831 = vmax.f32 %v826, 0.0
        %v833 = vrot.slane %v831, 1
        %834 = vrot.lane.b32.xlu0 %v833, 64
        %v835 = vpop.permute.xlu0 %834
        %v837 = vrot.slane %v831, 2
        %v839 = vrot.slane %v831, 3
        %840 = vrot.lane.b32.xlu0 %v839, 64
        %v841 = vpop.permute.xlu0 %840
        %v843 = vrot.slane %v831, 4
        %v845 = vrot.slane %v831, 5
        %846 = vrot.lane.b32.xlu0 %v845, 64
        %v847 = vpop.permute.xlu0 %846
        %v849 = vrot.slane %v831, 6
        %v851 = vrot.slane %v831, 7
        %852 = vrot.lane.b32.xlu0 %v851, 64
        %v853 = vpop.permute.xlu0 %852
        %v855 = vsel %vm295, %v831, %v835
        %v856 = vsel %vm295, %v837, %v841
        %v857 = vsel %vm295, %v843, %v847
        %v858 = vsel %vm295, %v849, %v853
        %v859 = vpack.c.bf16 %v855, %v855
        %v860 = vpack.c.bf16 %v856, %v856
        %v861 = vpack.c.bf16 %v857, %v857
        %v862 = vpack.c.bf16 %v858, %v858
        %v863 = vld [vmem:[%s5] sm:$0xf]
        %v864 = vld [vmem:[%s5 + $0x4] sm:$0xf]
        %v865 = vld [vmem:[%s5 + $0x8] sm:$0xf]
        %v866 = vld [vmem:[%s5 + $0xc] sm:$0xf]
        %v867 = vld [vmem:[%s5 + $0x10] sm:$0xf]
        %v868 = vld [vmem:[%s5 + $0x14] sm:$0xf]
        %v869 = vld [vmem:[%s5 + $0x18] sm:$0xf]
        %v870 = vld [vmem:[%s5 + $0x1c] sm:$0xf]
        %v871 = vld [vmem:[%s5 + $0x20] sm:$0xf]
        %v872 = vld [vmem:[%s5 + $0x24] sm:$0xf]
        %v873 = vld [vmem:[%s5 + $0x28] sm:$0xf]
        %v874 = vld [vmem:[%s5 + $0x2c] sm:$0xf]
        %v875 = vld [vmem:[%s5 + $0x30] sm:$0xf]
        %v876 = vld [vmem:[%s5 + $0x34] sm:$0xf]
        %v877 = vld [vmem:[%s5 + $0x38] sm:$0xf]
        %v878 = vld [vmem:[%s5 + $0x3c] sm:$0xf]
        %v879 = vld [vmem:[%s5 + $0x40] sm:$0xf]
        %v880 = vld [vmem:[%s5 + $0x44] sm:$0xf]
        %v881 = vld [vmem:[%s5 + $0x48] sm:$0xf]
        %v882 = vld [vmem:[%s5 + $0x4c] sm:$0xf]
        %v883 = vld [vmem:[%s5 + $0x50] sm:$0xf]
        %v884 = vld [vmem:[%s5 + $0x54] sm:$0xf]
        %v885 = vld [vmem:[%s5 + $0x58] sm:$0xf]
        %v886 = vld [vmem:[%s5 + $0x5c] sm:$0xf]
        %v887 = vld [vmem:[%s5 + $0x60] sm:$0xf]
        %v888 = vld [vmem:[%s5 + $0x64] sm:$0xf]
        %v889 = vld [vmem:[%s5 + $0x68] sm:$0xf]
        %v890 = vld [vmem:[%s5 + $0x6c] sm:$0xf]
        %v891 = vld [vmem:[%s5 + $0x70] sm:$0xf]
        %v892 = vld [vmem:[%s5 + $0x74] sm:$0xf]
        %v893 = vld [vmem:[%s5 + $0x78] sm:$0xf]
        %v894 = vld [vmem:[%s5 + $0x7c] sm:$0xf]
        %v895 = vld [vmem:[%s5 + $0x80] sm:$0xf]
        %v896 = vld [vmem:[%s5 + $0x84] sm:$0xf]
        %v897 = vld [vmem:[%s5 + $0x88] sm:$0xf]
        %v898 = vld [vmem:[%s5 + $0x8c] sm:$0xf]
        %v899 = vld [vmem:[%s5 + $0x90] sm:$0xf]
        %v900 = vld [vmem:[%s5 + $0x94] sm:$0xf]
        %v901 = vld [vmem:[%s5 + $0x98] sm:$0xf]
        %v902 = vld [vmem:[%s5 + $0x9c] sm:$0xf]
        %v903 = vld [vmem:[%s5 + $0xa0] sm:$0xf]
        %v904 = vld [vmem:[%s5 + $0xa4] sm:$0xf]
        %v905 = vld [vmem:[%s5 + $0xa8] sm:$0xf]
        %v906 = vld [vmem:[%s5 + $0xac] sm:$0xf]
        %v907 = vld [vmem:[%s5 + $0xb0] sm:$0xf]
        %v908 = vld [vmem:[%s5 + $0xb4] sm:$0xf]
        %v909 = vld [vmem:[%s5 + $0xb8] sm:$0xf]
        %v910 = vld [vmem:[%s5 + $0xbc] sm:$0xf]
        %v911 = vld [vmem:[%s5 + $0xc0] sm:$0xf]
        %v912 = vld [vmem:[%s5 + $0xc4] sm:$0xf]
        %v913 = vld [vmem:[%s5 + $0xc8] sm:$0xf]
        %v914 = vld [vmem:[%s5 + $0xcc] sm:$0xf]
        %v915 = vld [vmem:[%s5 + $0xd0] sm:$0xf]
        %v916 = vld [vmem:[%s5 + $0xd4] sm:$0xf]
        %v917 = vld [vmem:[%s5 + $0xd8] sm:$0xf]
        %v918 = vld [vmem:[%s5 + $0xdc] sm:$0xf]
        %v919 = vld [vmem:[%s5 + $0xe0] sm:$0xf]
        %v920 = vld [vmem:[%s5 + $0xe4] sm:$0xf]
        %v921 = vld [vmem:[%s5 + $0xe8] sm:$0xf]
        %v922 = vld [vmem:[%s5 + $0xec] sm:$0xf]
        %v923 = vld [vmem:[%s5 + $0xf0] sm:$0xf]
        %v924 = vld [vmem:[%s5 + $0xf4] sm:$0xf]
        %v925 = vld [vmem:[%s5 + $0xf8] sm:$0xf]
        %v926 = vld [vmem:[%s5 + $0xfc] sm:$0xf]
        %v927 = vld [vmem:[%s6] sm:$0x1]
        %v992 = vunpack.c.l.b16 %v863
        %v993 = vunpack.c.l.b16 %v864
        %v994 = vunpack.c.l.b16 %v865
        %v995 = vunpack.c.l.b16 %v866
        %v996 = vunpack.c.l.b16 %v867
        %v997 = vunpack.c.l.b16 %v868
        %v998 = vunpack.c.l.b16 %v869
        %v999 = vunpack.c.l.b16 %v870
        %v1000 = vunpack.c.l.b16 %v871
        %v1001 = vunpack.c.l.b16 %v872
        %v1002 = vunpack.c.l.b16 %v873
        %v1003 = vunpack.c.l.b16 %v874
        %v1004 = vunpack.c.l.b16 %v875
        %v1005 = vunpack.c.l.b16 %v876
        %v1006 = vunpack.c.l.b16 %v877
        %v1007 = vunpack.c.l.b16 %v878
        %v1008 = vunpack.c.l.b16 %v879
        %v1009 = vunpack.c.l.b16 %v880
        %v1010 = vunpack.c.l.b16 %v881
        %v1011 = vunpack.c.l.b16 %v882
        %v1012 = vunpack.c.l.b16 %v883
        %v1013 = vunpack.c.l.b16 %v884
        %v1014 = vunpack.c.l.b16 %v885
        %v1015 = vunpack.c.l.b16 %v886
        %v1016 = vunpack.c.l.b16 %v887
        %v1017 = vunpack.c.l.b16 %v888
        %v1018 = vunpack.c.l.b16 %v889
        %v1019 = vunpack.c.l.b16 %v890
        %v1020 = vunpack.c.l.b16 %v891
        %v1021 = vunpack.c.l.b16 %v892
        %v1022 = vunpack.c.l.b16 %v893
        %v1023 = vunpack.c.l.b16 %v894
        %v1024 = vunpack.c.l.b16 %v895
        %v1025 = vunpack.c.l.b16 %v896
        %v1026 = vunpack.c.l.b16 %v897
        %v1027 = vunpack.c.l.b16 %v898
        %v1028 = vunpack.c.l.b16 %v899
        %v1029 = vunpack.c.l.b16 %v900
        %v1030 = vunpack.c.l.b16 %v901
        %v1031 = vunpack.c.l.b16 %v902
        %v1032 = vunpack.c.l.b16 %v903
        %v1033 = vunpack.c.l.b16 %v904
        %v1034 = vunpack.c.l.b16 %v905
        %v1035 = vunpack.c.l.b16 %v906
        %v1036 = vunpack.c.l.b16 %v907
        %v1037 = vunpack.c.l.b16 %v908
        %v1038 = vunpack.c.l.b16 %v909
        %v1039 = vunpack.c.l.b16 %v910
        %v1040 = vunpack.c.l.b16 %v911
        %v1041 = vunpack.c.l.b16 %v912
        %v1042 = vunpack.c.l.b16 %v913
        %v1043 = vunpack.c.l.b16 %v914
        %v1044 = vunpack.c.l.b16 %v915
        %v1045 = vunpack.c.l.b16 %v916
        %v1046 = vunpack.c.l.b16 %v917
        %v1047 = vunpack.c.l.b16 %v918
        %v1048 = vunpack.c.l.b16 %v919
        %v1049 = vunpack.c.l.b16 %v920
        %v1050 = vunpack.c.l.b16 %v921
        %v1051 = vunpack.c.l.b16 %v922
        %v1052 = vunpack.c.l.b16 %v923
        %v1053 = vunpack.c.l.b16 %v924
        %v1054 = vunpack.c.l.b16 %v925
        %v1055 = vunpack.c.l.b16 %v926
        %v1056 = vpack.c.b16 %v993, %v992
        %v1057 = vpack.c.b16 %v995, %v994
        %v1058 = vpack.c.b16 %v997, %v996
        %v1059 = vpack.c.b16 %v999, %v998
        %v1060 = vpack.c.b16 %v1001, %v1000
        %v1061 = vpack.c.b16 %v1003, %v1002
        %v1062 = vpack.c.b16 %v1005, %v1004
        %v1063 = vpack.c.b16 %v1007, %v1006
        %v1064 = vpack.c.b16 %v1009, %v1008
        %v1065 = vpack.c.b16 %v1011, %v1010
        %v1066 = vpack.c.b16 %v1013, %v1012
        %v1067 = vpack.c.b16 %v1015, %v1014
        %v1068 = vpack.c.b16 %v1017, %v1016
        %v1069 = vpack.c.b16 %v1019, %v1018
        %v1070 = vpack.c.b16 %v1021, %v1020
        %v1071 = vpack.c.b16 %v1023, %v1022
        %v1072 = vpack.c.b16 %v1025, %v1024
        %v1073 = vpack.c.b16 %v1027, %v1026
        %v1074 = vpack.c.b16 %v1029, %v1028
        %v1075 = vpack.c.b16 %v1031, %v1030
        %v1076 = vpack.c.b16 %v1033, %v1032
        %v1077 = vpack.c.b16 %v1035, %v1034
        %v1078 = vpack.c.b16 %v1037, %v1036
        %v1079 = vpack.c.b16 %v1039, %v1038
        %v1080 = vpack.c.b16 %v1041, %v1040
        %v1081 = vpack.c.b16 %v1043, %v1042
        %v1082 = vpack.c.b16 %v1045, %v1044
        %v1083 = vpack.c.b16 %v1047, %v1046
        %v1084 = vpack.c.b16 %v1049, %v1048
        %v1085 = vpack.c.b16 %v1051, %v1050
        %v1086 = vpack.c.b16 %v1053, %v1052
        %v1087 = vpack.c.b16 %v1055, %v1054
        %1120 = vmatprep.subr.bf16.mxu0 0
        %1121 = vmatpush1.bf16.msra.mxu0 %v1063
        %1122 = vmatprep.subr.bf16.mxu0 0
        %1123 = vmatpush1.bf16.msra.mxu0 %v1062
        %1124 = vmatprep.subr.bf16.mxu0 0
        %1125 = vmatpush1.bf16.msra.mxu0 %v1061
        %1126 = vmatprep.subr.bf16.mxu0 0
        %1127 = vmatpush1.bf16.msra.mxu0 %v1060
        %1128 = vmatprep.subr.bf16.mxu0 0
        %1129 = vmatpush1.bf16.msra.mxu0 %v1059
        %1130 = vmatprep.subr.bf16.mxu0 0
        %1131 = vmatpush1.bf16.msra.mxu0 %v1058
        %1132 = vmatprep.subr.bf16.mxu0 0
        %1133 = vmatpush1.bf16.msra.mxu0 %v1057
        %1134 = vmatprep.subr.bf16.mxu0 0
        %1135 = vmatpush1.bf16.msra.mxu0 %v1056
        %1136 = vmatprep.subr.bf16.mxu0 0
        %1137 = vmatpush2.bf16.msra.mxu0 %v1071
        %1138 = vmatprep.subr.bf16.mxu0 0
        %1139 = vmatpush2.bf16.msra.mxu0 %v1070
        %1140 = vmatprep.subr.bf16.mxu0 0
        %1141 = vmatpush2.bf16.msra.mxu0 %v1069
        %1142 = vmatprep.subr.bf16.mxu0 0
        %1143 = vmatpush2.bf16.msra.mxu0 %v1068
        %1144 = vmatprep.subr.bf16.mxu0 0
        %1145 = vmatpush2.bf16.msra.mxu0 %v1067
        %1146 = vmatprep.subr.bf16.mxu0 0
        %1147 = vmatpush2.bf16.msra.mxu0 %v1066
        %1148 = vmatprep.subr.bf16.mxu0 0
        %1149 = vmatpush2.bf16.msra.mxu0 %v1065
        %1150 = vmatprep.subr.bf16.mxu0 0
        %1151 = vmatpush2.bf16.msra.mxu0 %v1064
        %1152 = vmatprep.mubr.bf16.mxu0 %v860
        %1153 = vmatmul.mubr.bf16.gmra.mxu0 %v859
        %v1154 = vpop.f32.mrf.mxu0
        %v1155 = vadd.f32 %v927, %v1154
        %v1156 = vpop.f32.mrf.mxu0
        %v1157 = vpop.f32.mrf.mxu0
        %v1158 = vpop.f32.mrf.mxu0
        %1159 = vdwg.mxu0
        %1160 = vmatprep.subr.bf16.mxu0 0
        %1161 = vmatpush1.bf16.msra.mxu0 %v1079
        %1162 = vmatprep.subr.bf16.mxu0 0
        %1163 = vmatpush1.bf16.msra.mxu0 %v1078
        %1164 = vmatprep.subr.bf16.mxu0 0
        %1165 = vmatpush1.bf16.msra.mxu0 %v1077
        %1166 = vmatprep.subr.bf16.mxu0 0
        %1167 = vmatpush1.bf16.msra.mxu0 %v1076
        %1168 = vmatprep.subr.bf16.mxu0 0
        %1169 = vmatpush1.bf16.msra.mxu0 %v1075
        %1170 = vmatprep.subr.bf16.mxu0 0
        %1171 = vmatpush1.bf16.msra.mxu0 %v1074
        %1172 = vmatprep.subr.bf16.mxu0 0
        %1173 = vmatpush1.bf16.msra.mxu0 %v1073
        %1174 = vmatprep.subr.bf16.mxu0 0
        %1175 = vmatpush1.bf16.msra.mxu0 %v1072
        %1176 = vmatprep.subr.bf16.mxu0 0
        %1177 = vmatpush2.bf16.msra.mxu0 %v1087
        %1178 = vmatprep.subr.bf16.mxu0 0
        %1179 = vmatpush2.bf16.msra.mxu0 %v1086
        %1180 = vmatprep.subr.bf16.mxu0 0
        %1181 = vmatpush2.bf16.msra.mxu0 %v1085
        %1182 = vmatprep.subr.bf16.mxu0 0
        %1183 = vmatpush2.bf16.msra.mxu0 %v1084
        %1184 = vmatprep.subr.bf16.mxu0 0
        %1185 = vmatpush2.bf16.msra.mxu0 %v1083
        %1186 = vmatprep.subr.bf16.mxu0 0
        %1187 = vmatpush2.bf16.msra.mxu0 %v1082
        %1188 = vmatprep.subr.bf16.mxu0 0
        %1189 = vmatpush2.bf16.msra.mxu0 %v1081
        %1190 = vmatprep.subr.bf16.mxu0 0
        %1191 = vmatpush2.bf16.msra.mxu0 %v1080
        %1192 = vmatprep.mubr.bf16.mxu0 %v862
        %1193 = vmatmul.mubr.bf16.gmra.mxu0 %v861
        %v1194 = vpop.f32.mrf.mxu0
        %v1195 = vadd.f32 %v1155, %v1194
        %v1196 = vpop.f32.mrf.mxu0
        %v1197 = vpop.f32.mrf.mxu0
        %v1198 = vpop.f32.mrf.mxu0
        %1199 = vdwg.mxu0
        %vm1200 = vcmask 73728
        %1201 = vst.msk [vmem:[%s268] sm:$0x1] %vm1200, %v1195
        %s1202 = sand.u32 %s181, 1
        %s1203 = scalar_lea.sflag [#allocation3], %s1202
        %s1204 = sand.u32 %s181, 1
        %s1205 = scalar_lea.vmem [#allocation2], %s1204
        // Predicated region
        $region49: #{nas_forward.1} parent=47 // pred_check
          %p1206 = pneg %p191
        $region50: #{nas_forward.1} parent=47 // pred_check_branch
          %1208 = sbr.rel (%p1206) target = $region52
        $region51: #{nas_forward.1} parent=47 // pred_region
          %s1210 = ssub.s32 16, 16
          %1211 = vsyncadd %s1203, %s1210
          %s1212 = smul.addr %s21, 16
          %s1213 = scalar_lea.hbm %s7, %s1212
          %s1215 = sshll.u32 %s1205, 4
          %s1216 = int_to_ptr.vmem [resolvable:$true] %s1215
          %1218 = dma.vmem_to_hbm [thread:$0]  %s1216, 16, %s1213, %s1203
        $region52: #{nas_forward.1} parent=47 // pred_fallthru
          _
      $region48: #{nas_forward.1} parent=5 // pred_fallthru
        _
      %p1219 = scmp.le.s32.totalorder 2, %s16
      // Predicated region
      $region53: #{nas_forward.1} parent=5 // pred_check
        %p1220 = pneg %p1219
      $region54: #{nas_forward.1} parent=5 // pred_check_branch
        %1222 = sbr.rel (%p1220) target = $region56
      $region55: #{nas_forward.1} parent=5 // pred_region
        %s1223 = ssub.s32 %s16, 2
        // Predicated region
        $region57: #{nas_forward.1} parent=55 // pred_check
          %p1224 = pneg %p197
        $region58: #{nas_forward.1} parent=55 // pred_check_branch
          %1226 = sbr.rel (%p1224) target = $region60
        $region59: #{nas_forward.1} parent=55 // pred_region
          %s1227 = sand.u32 %s182, 1
          %s1228 = scalar_lea.sflag [#allocation3], %s1227
          %s1229 = sand.u32 %s182, 1
          %s1230 = scalar_lea.vmem [#allocation2], %s1229
          %1231 = dma.done %s1228, 16
        $region60: #{nas_forward.1} parent=55 // pred_fallthru
          _
      $region56: #{nas_forward.1} parent=5 // pred_fallthru
        _
    $region6: #{nas_forward.1} parent=1 // loop_footer
      %s20 = sadd.s32 1, %s16
    $region7: #{nas_forward.1} parent=1 // loop_footer_branch
      %15 = sbr.rel target = $region3
    $region8: #{nas_forward.1} parent=1 // loop_exit
      _
    %1232 = vsyncpa [#allocation3], 1
    %s1233 = scalar_lea.sflag [#allocation3], 1
    %1234 = vsyncpa %s1233, 1

</llo_original>
